<compile_context>
chip_gen: v5e
topology: v5e:2x2
jax: 0.10.0
libtpu: 0.0.40
codegen_flags: <defaults>
</compile_context>

<pallas_src>
import jax
import jax.numpy as jnp
from jax.experimental import pallas as pl
from jax.experimental.pallas import tpu as pltpu


NEG_SLOPE = 0.01   # PyTorch nn.LeakyReLU default
FEAT = 128         # lane-padded feature width used for every layer
N_LAYERS = 4


def _leaky_relu(v):
    return jnp.where(v > 0, v, NEG_SLOPE * v)


def _round_up(x, m):
    return (x + m - 1) // m * m


def dqn_kernel(x_ref, w_ref, b_ref, o_ref):
    # x_ref: (TB, FEAT)            activation tile (batch on sublanes)
    # w_ref: (4, FEAT, FEAT)       zero-padded weights, layout [in, out]
    # b_ref: (8, FEAT)             rows 0..3 = zero-padded biases
    # o_ref: (TB, FEAT)            lane-dense padded output
    h = x_ref[...]
    b = b_ref[...]
    for i in range(N_LAYERS):
        h = jnp.dot(h, w_ref[i], preferred_element_type=jnp.float32) + b[i:i + 1, :]
        if i < N_LAYERS - 1:
            h = _leaky_relu(h)
    o_ref[...] = h
    # TODO(synk): for large MXU-bound batches on v5e/v6e, cast matmul operands
    # to bf16 (keeping fp32 accumulation); kept fp32 here for exactness.


def pack_params(params):
    """Pack 4 (W[in,out], b[1,out]) pairs into zero-padded VMEM slabs."""
    w_slab = jnp.zeros((N_LAYERS, FEAT, FEAT), jnp.float32)
    b_slab = jnp.zeros((8, FEAT), jnp.float32)
    for i, (w, bias) in enumerate(params):
        fin, fout = w.shape
        w_slab = w_slab.at[i, :fin, :fout].set(w)
        b_slab = b_slab.at[i, :fout].set(bias.reshape(-1))
    return w_slab, b_slab


def dqn_forward(x, params):
    """x: [B, n_observations] float32; params: list of (W[in,out], b[1,out])."""
    B, n_obs = x.shape
    n_actions = params[-1][0].shape[1]

    w_slab, b_slab = pack_params(params)

    # Batch tile: up to 512 rows per grid step (measured ~85% HBM roofline),
    # rounded to the sublane granule of 8.
    TB = min(512, _round_up(B, 8))
    padded_B = _round_up(B, TB)
    grid = (padded_B // TB,)

    # Zero-pad batch rows and feature lanes (zeros propagate exactly through
    # Linear + LeakyReLU and are sliced off below).
    x_pad = jnp.zeros((padded_B, FEAT), jnp.float32).at[:B, :n_obs].set(x)

    out_pad = pl.pallas_call(
        dqn_kernel,
        out_shape=jax.ShapeDtypeStruct((padded_B, FEAT), jnp.float32),
        grid=grid,
        in_specs=[
            pl.BlockSpec((TB, FEAT), lambda i: (i, 0)),                 # streamed
            pl.BlockSpec((N_LAYERS, FEAT, FEAT), lambda i: (0, 0, 0)),  # resident
            pl.BlockSpec((8, FEAT), lambda i: (0, 0)),                  # resident
        ],
        out_specs=pl.BlockSpec((TB, FEAT), lambda i: (i, 0)),
        compiler_params=pltpu.CompilerParams(
            dimension_semantics=("parallel",)),
    )(x_pad, w_slab, b_slab)

    return out_pad[:B, :n_actions]


def init_params(key, n_observations, n_actions, n_units=16):
    """Deterministic init mimicking PyTorch Linear (uniform +/- 1/sqrt(fan_in)).

    Returned weights are already transposed to [in, out] for the kernel.
    """
    dims = [(n_observations, n_units),
            (n_units, n_units),
            (n_units, n_units),
            (n_units, n_actions)]
    params = []
    for (fan_in, fan_out) in dims:
        key, kw, kb = jax.random.split(key, 3)
        bound = 1.0 / jnp.sqrt(jnp.float32(fan_in))
        w = jax.random.uniform(kw, (fan_in, fan_out), jnp.float32, -bound, bound)
        b = jax.random.uniform(kb, (1, fan_out), jnp.float32, -bound, bound)
        params.append((w, b))
    return params


def dqn_reference(x, params):
    """Pure-JAX reference of the same forward pass."""
    h = x
    for i, (w, b) in enumerate(params):
        h = h @ w + b
        if i < len(params) - 1:
            h = jnp.where(h > 0, h, NEG_SLOPE * h)
    return h


if __name__ == "__main__":
    key = jax.random.PRNGKey(0)
    n_observations = 4   # e.g. cartesian/polar state features
    n_actions = 2
    n_units = 16

    key, kp = jax.random.split(key)
    params = init_params(kp, n_observations, n_actions, n_units)

    # Small batch (single grid step, latency-bound path).
    key, kx = jax.random.split(key)
    x_small = jax.random.normal(kx, (8, n_observations), jnp.float32)
    out_small = jax.block_until_ready(dqn_forward(x_small, params))
    ref_small = dqn_reference(x_small, params)
    assert out_small.shape == (8, n_actions)
    assert jnp.allclose(out_small, ref_small, atol=1e-5, rtol=1e-5)

    # Larger batch exercising the batch grid (padding 600 -> 1024 = 2 x 512 tiles).
    key, kx2 = jax.random.split(key)
    x_big = jax.random.normal(kx2, (600, n_observations), jnp.float32)
    out_big = jax.block_until_ready(dqn_forward(x_big, params))
    ref_big = dqn_reference(x_big, params)
    assert out_big.shape == (600, n_actions)
    assert jnp.allclose(out_big, ref_big, atol=1e-4, rtol=1e-4)

    print("KERNEL_OK")
</pallas_src>

<mosaic_0001>
module attributes {stable_mosaic.version = 11 : i64} {
  func.func @dqn_kernel(%arg0: i32, %arg1: memref<8x128xf32, #tpu.memory_space<vmem>>, %arg2: memref<4x128x128xf32, #tpu.memory_space<vmem>>, %arg3: memref<8x128xf32, #tpu.memory_space<vmem>>, %arg4: memref<8x128xf32, #tpu.memory_space<vmem>>) attributes {dimension_semantics = [#tpu.dimension_semantics<parallel>], iteration_bounds = array<i64: 1>, scalar_prefetch = 0 : i64, scratch_operands = 0 : i64, tpu.core_type = #tpu.core_type<tc>, window_params = [{transform_indices = @transform_0, window_bounds = array<i64: 8, 128>}, {pipeline_mode = #tpu.pipeline_mode<synchronous>, transform_indices = @transform_1, window_bounds = array<i64: 4, 128, 128>}, {pipeline_mode = #tpu.pipeline_mode<synchronous>, transform_indices = @transform_2, window_bounds = array<i64: 8, 128>}, {transform_indices = @transform_3, window_bounds = array<i64: 8, 128>}]} {
    %c0 = arith.constant 0 : index
    %c0_0 = arith.constant 0 : index
    %0 = vector.load %arg1[%c0, %c0_0] : memref<8x128xf32, #tpu.memory_space<vmem>>, vector<8x128xf32>
    %c0_1 = arith.constant 0 : index
    %c0_2 = arith.constant 0 : index
    %1 = vector.load %arg3[%c0_1, %c0_2] : memref<8x128xf32, #tpu.memory_space<vmem>>, vector<8x128xf32>
    %c0_3 = arith.constant 0 : index
    %c0_4 = arith.constant 0 : index
    %c0_5 = arith.constant 0 : index
    %2 = vector.load %arg2[%c0_3, %c0_4, %c0_5] : memref<4x128x128xf32, #tpu.memory_space<vmem>>, vector<1x128x128xf32>
    %3 = vector.shape_cast %2 : vector<1x128x128xf32> to vector<128x128xf32>
    %cst = arith.constant dense<0.000000e+00> : vector<8x128xf32>
    %4 = tpu.matmul %0, %3, %cst {dimension_numbers = #tpu.dot_dimension_numbers<[1], [0], [0], [1], [0, 0, 1, 1], [], []>} : vector<8x128xf32>, vector<128x128xf32>, vector<8x128xf32> -> vector<8x128xf32>
    %5 = vector.extract_strided_slice %1 {offsets = [0, 0], sizes = [1, 128], strides = [1, 1]} : vector<8x128xf32> to vector<1x128xf32>
    %6 = vector.broadcast %5 : vector<1x128xf32> to vector<8x128xf32>
    %7 = arith.addf %4, %6 : vector<8x128xf32>
    %cst_6 = arith.constant 0.000000e+00 : f32
    %8 = vector.broadcast %cst_6 : f32 to vector<8x128xf32>
    %9 = arith.cmpf ogt, %7, %8 : vector<8x128xf32>
    %cst_7 = arith.constant 0.00999999977 : f32
    %10 = vector.broadcast %cst_7 : f32 to vector<8x128xf32>
    %11 = arith.mulf %10, %7 : vector<8x128xf32>
    %12 = arith.select %9, %7, %11 : vector<8x128xi1>, vector<8x128xf32>
    %c1 = arith.constant 1 : index
    %c0_8 = arith.constant 0 : index
    %c0_9 = arith.constant 0 : index
    %13 = vector.load %arg2[%c1, %c0_8, %c0_9] : memref<4x128x128xf32, #tpu.memory_space<vmem>>, vector<1x128x128xf32>
    %14 = vector.shape_cast %13 : vector<1x128x128xf32> to vector<128x128xf32>
    %cst_10 = arith.constant dense<0.000000e+00> : vector<8x128xf32>
    %15 = tpu.matmul %12, %14, %cst_10 {dimension_numbers = #tpu.dot_dimension_numbers<[1], [0], [0], [1], [0, 0, 1, 1], [], []>} : vector<8x128xf32>, vector<128x128xf32>, vector<8x128xf32> -> vector<8x128xf32>
    %16 = vector.extract_strided_slice %1 {offsets = [1, 0], sizes = [1, 128], strides = [1, 1]} : vector<8x128xf32> to vector<1x128xf32>
    %17 = vector.broadcast %16 : vector<1x128xf32> to vector<8x128xf32>
    %18 = arith.addf %15, %17 : vector<8x128xf32>
    %cst_11 = arith.constant 0.000000e+00 : f32
    %19 = vector.broadcast %cst_11 : f32 to vector<8x128xf32>
    %20 = arith.cmpf ogt, %18, %19 : vector<8x128xf32>
    %cst_12 = arith.constant 0.00999999977 : f32
    %21 = vector.broadcast %cst_12 : f32 to vector<8x128xf32>
    %22 = arith.mulf %21, %18 : vector<8x128xf32>
    %23 = arith.select %20, %18, %22 : vector<8x128xi1>, vector<8x128xf32>
    %c2 = arith.constant 2 : index
    %c0_13 = arith.constant 0 : index
    %c0_14 = arith.constant 0 : index
    %24 = vector.load %arg2[%c2, %c0_13, %c0_14] : memref<4x128x128xf32, #tpu.memory_space<vmem>>, vector<1x128x128xf32>
    %25 = vector.shape_cast %24 : vector<1x128x128xf32> to vector<128x128xf32>
    %cst_15 = arith.constant dense<0.000000e+00> : vector<8x128xf32>
    %26 = tpu.matmul %23, %25, %cst_15 {dimension_numbers = #tpu.dot_dimension_numbers<[1], [0], [0], [1], [0, 0, 1, 1], [], []>} : vector<8x128xf32>, vector<128x128xf32>, vector<8x128xf32> -> vector<8x128xf32>
    %27 = vector.extract_strided_slice %1 {offsets = [2, 0], sizes = [1, 128], strides = [1, 1]} : vector<8x128xf32> to vector<1x128xf32>
    %28 = vector.broadcast %27 : vector<1x128xf32> to vector<8x128xf32>
    %29 = arith.addf %26, %28 : vector<8x128xf32>
    %cst_16 = arith.constant 0.000000e+00 : f32
    %30 = vector.broadcast %cst_16 : f32 to vector<8x128xf32>
    %31 = arith.cmpf ogt, %29, %30 : vector<8x128xf32>
    %cst_17 = arith.constant 0.00999999977 : f32
    %32 = vector.broadcast %cst_17 : f32 to vector<8x128xf32>
    %33 = arith.mulf %32, %29 : vector<8x128xf32>
    %34 = arith.select %31, %29, %33 : vector<8x128xi1>, vector<8x128xf32>
    %c3 = arith.constant 3 : index
    %c0_18 = arith.constant 0 : index
    %c0_19 = arith.constant 0 : index
    %35 = vector.load %arg2[%c3, %c0_18, %c0_19] : memref<4x128x128xf32, #tpu.memory_space<vmem>>, vector<1x128x128xf32>
    %36 = vector.shape_cast %35 : vector<1x128x128xf32> to vector<128x128xf32>
    %cst_20 = arith.constant dense<0.000000e+00> : vector<8x128xf32>
    %37 = tpu.matmul %34, %36, %cst_20 {dimension_numbers = #tpu.dot_dimension_numbers<[1], [0], [0], [1], [0, 0, 1, 1], [], []>} : vector<8x128xf32>, vector<128x128xf32>, vector<8x128xf32> -> vector<8x128xf32>
    %38 = vector.extract_strided_slice %1 {offsets = [3, 0], sizes = [1, 128], strides = [1, 1]} : vector<8x128xf32> to vector<1x128xf32>
    %39 = vector.broadcast %38 : vector<1x128xf32> to vector<8x128xf32>
    %40 = arith.addf %37, %39 : vector<8x128xf32>
    %c0_21 = arith.constant 0 : index
    %c0_22 = arith.constant 0 : index
    %41 = vector.load %arg4[%c0_21, %c0_22] : memref<8x128xf32, #tpu.memory_space<vmem>>, vector<8x128xf32>
    tpu.vector_store %arg4[%c0_21, %c0_22], %40 {strides = array<i32>} : memref<8x128xf32, #tpu.memory_space<vmem>>, vector<8x128xf32>,
    return
  }
  func.func @transform_0(%arg0: i32) -> (i32, i32) {
    %c0_i32 = arith.constant 0 : i32
    %c0_i32_0 = arith.constant 0 : i32
    return %arg0, %c0_i32 : i32, i32
  }
  func.func @transform_1(%arg0: i32) -> (i32, i32, i32) {
    %c0_i32 = arith.constant 0 : i32
    %c0_i32_0 = arith.constant 0 : i32
    %c0_i32_1 = arith.constant 0 : i32
    %c0_i32_2 = arith.constant 0 : i32
    return %c0_i32, %c0_i32_0, %c0_i32_1 : i32, i32, i32
  }
  func.func @transform_2(%arg0: i32) -> (i32, i32) {
    %c0_i32 = arith.constant 0 : i32
    %c0_i32_0 = arith.constant 0 : i32
    %c0_i32_1 = arith.constant 0 : i32
    return %c0_i32, %c0_i32_0 : i32, i32
  }
  func.func @transform_3(%arg0: i32) -> (i32, i32) {
    %c0_i32 = arith.constant 0 : i32
    %c0_i32_0 = arith.constant 0 : i32
    return %arg0, %c0_i32 : i32, i32
  }
}

</mosaic_0001>

<llo_original>
// kernel: tpu_custom_call.1
$region0: #{tpu_custom_call.1}
  #allocation0 [shape = 'u32[]', space=smem, size = 0x4, offset = 0x4, fixed_abs, tag = 'smem constant byte address 0x4 - core index']
  #allocation1 [shape = 'u32[72,128]{1,0:T(1,128)}', space=vmem, size = 0x9000, scoped, tag = 'internal scratch']
  %s0 = inlined_call_operand.hbm [shape: f32[8,128], index: 0, kind: input, shape index: {}]
  %s1 = inlined_call_operand.hbm [shape: f32[4,128,128], index: 1, kind: input, shape index: {}]
  %s2 = inlined_call_operand.hbm [shape: f32[8,128], index: 2, kind: input, shape index: {}]
  %s3 = inlined_call_operand.hbm [shape: f32[8,128], index: 3, kind: output, shape index: {}]
  %s4 = sld [smem:[#allocation0]]
  $region34: #{tpu_custom_call.1} parent=0
    _
  %s6 = ssub.s32 1, %s4
  %s7 = scalar_select 0, %s6, %s4
  $region1: #{tpu_custom_call.1} parent=0
    #allocation2 [shape = 'u8[4096]{0}', space=vmem, size = 0x1000, scoped, tag = 'input window, operand 0, single buffered']
    #allocation3 [shape = 's32[1]{0}', space=sflag, size = 0x4, scoped, tag = 'scoped memory for tpu_custom_call.1']
    #allocation4 [shape = 's32[1]{0}', space=sflag, size = 0x4, scoped, tag = 'scoped memory for tpu_custom_call.1']
    #allocation5 [shape = 'u8[262144]{0}', space=vmem, size = 0x40000, scoped, tag = 'input window, operand 1, single buffered']
    #allocation6 [shape = 's32[1]{0}', space=sflag, size = 0x4, scoped, tag = 'scoped memory for tpu_custom_call.1']
    #allocation7 [shape = 'u8[4096]{0}', space=vmem, size = 0x1000, scoped, tag = 'input window, operand 2, single buffered']
    #allocation8 [shape = 'u8[4096]{0}', space=vmem, size = 0x1000, scoped, tag = 'output window, operand 0, single buffered']
    %8 = vsyncpa [#allocation3], 0
    %9 = vsyncpa [#allocation6], 0
    %10 = vsyncpa [#allocation4], 0
    // Predicated region
    $region2: #{tpu_custom_call.1} parent=1 // pred_check
      _
    $region3: #{tpu_custom_call.1} parent=1 // pred_check_branch
      %12 = sbr.rel (0) target = $region5
    $region4: #{tpu_custom_call.1} parent=1 // pred_region
      %14 = vsyncadd [#allocation3], 0
      %s16 = sshll.u32 %s0, 4
      %s17 = int_to_ptr.hbm [resolvable:$true] %s16
      %s18 = sshll.u32 [#allocation2], 4
      %s19 = int_to_ptr.vmem [resolvable:$true] %s18
      %21 = dma.hbm_to_vmem [thread:$0]  %s17, 128, %s19, [#allocation3]
    $region5: #{tpu_custom_call.1} parent=1 // pred_fallthru
      _
    // Predicated region
    $region6: #{tpu_custom_call.1} parent=1 // pred_check
      _
    $region7: #{tpu_custom_call.1} parent=1 // pred_check_branch
      %23 = sbr.rel (0) target = $region9
    $region8: #{tpu_custom_call.1} parent=1 // pred_region
      %25 = vsyncadd [#allocation6], 0
      %s26 = sshll.u32 %s1, 4
      %s27 = int_to_ptr.hbm [resolvable:$true] %s26
      %s28 = sshll.u32 [#allocation5], 4
      %s29 = int_to_ptr.vmem [resolvable:$true] %s28
      %34 = dma.hbm_to_vmem [thread:$0]  %s27, 8192, %s29, [#allocation6], 128, 128, 8
    $region9: #{tpu_custom_call.1} parent=1 // pred_fallthru
      _
    // Predicated region
    $region10: #{tpu_custom_call.1} parent=1 // pred_check
      _
    $region11: #{tpu_custom_call.1} parent=1 // pred_check_branch
      %36 = sbr.rel (0) target = $region13
    $region12: #{tpu_custom_call.1} parent=1 // pred_region
      %38 = vsyncadd [#allocation6], 0
      %s40 = sshll.u32 %s2, 4
      %s41 = int_to_ptr.hbm [resolvable:$true] %s40
      %s42 = sshll.u32 [#allocation7], 4
      %s43 = int_to_ptr.vmem [resolvable:$true] %s42
      %45 = dma.hbm_to_vmem [thread:$0]  %s41, 128, %s43, [#allocation6]
    $region13: #{tpu_custom_call.1} parent=1 // pred_fallthru
      _
    // Predicated region
    $region14: #{tpu_custom_call.1} parent=1 // pred_check
      _
    $region15: #{tpu_custom_call.1} parent=1 // pred_check_branch
      %47 = sbr.rel (0) target = $region17
    $region16: #{tpu_custom_call.1} parent=1 // pred_region
      %49 = dma.done [#allocation3], 128
    $region17: #{tpu_custom_call.1} parent=1 // pred_fallthru
      _
    // Predicated region
    $region18: #{tpu_custom_call.1} parent=1 // pred_check
      _
    $region19: #{tpu_custom_call.1} parent=1 // pred_check_branch
      %51 = sbr.rel (0) target = $region21
    $region20: #{tpu_custom_call.1} parent=1 // pred_region
      %53 = dma.done [#allocation6], 8192
    $region21: #{tpu_custom_call.1} parent=1 // pred_fallthru
      _
    // Predicated region
    $region22: #{tpu_custom_call.1} parent=1 // pred_check
      _
    $region23: #{tpu_custom_call.1} parent=1 // pred_check_branch
      %55 = sbr.rel (0) target = $region25
    $region24: #{tpu_custom_call.1} parent=1 // pred_region
      %57 = dma.done [#allocation6], 128
    $region25: #{tpu_custom_call.1} parent=1 // pred_fallthru
      _
    %v58 = vld [vmem:[#allocation2] sm:$0xff]
    %v59 = vld [vmem:[#allocation7] sm:$0xff]
    %v60 = vld [vmem:[#allocation5] sm:$0xff]
    %v61 = vld [vmem:[#allocation5 + $0x8] sm:$0xff]
    %v62 = vld [vmem:[#allocation5 + $0x10] sm:$0xff]
    %v63 = vld [vmem:[#allocation5 + $0x18] sm:$0xff]
    %v64 = vld [vmem:[#allocation5 + $0x20] sm:$0xff]
    %v65 = vld [vmem:[#allocation5 + $0x28] sm:$0xff]
    %v66 = vld [vmem:[#allocation5 + $0x30] sm:$0xff]
    %v67 = vld [vmem:[#allocation5 + $0x38] sm:$0xff]
    %v68 = vld [vmem:[#allocation5 + $0x40] sm:$0xff]
    %v69 = vld [vmem:[#allocation5 + $0x48] sm:$0xff]
    %v70 = vld [vmem:[#allocation5 + $0x50] sm:$0xff]
    %v71 = vld [vmem:[#allocation5 + $0x58] sm:$0xff]
    %v72 = vld [vmem:[#allocation5 + $0x60] sm:$0xff]
    %v73 = vld [vmem:[#allocation5 + $0x68] sm:$0xff]
    %v74 = vld [vmem:[#allocation5 + $0x70] sm:$0xff]
    %v75 = vld [vmem:[#allocation5 + $0x78] sm:$0xff]
    %v76 = vperm.slane %v59, 0
    %77 = vmatpush.msra.mxu0 %v75
    %78 = vmatpush.msra.mxu0 %v74
    %79 = vmatpush.msra.mxu0 %v73
    %80 = vmatpush.msra.mxu0 %v72
    %81 = vmatpush.msra.mxu0 %v71
    %82 = vmatpush.msra.mxu0 %v70
    %83 = vmatpush.msra.mxu0 %v69
    %84 = vmatpush.msra.mxu0 %v68
    %85 = vmatpush.msra.mxu0 %v67
    %86 = vmatpush.msra.mxu0 %v66
    %87 = vmatpush.msra.mxu0 %v65
    %88 = vmatpush.msra.mxu0 %v64
    %89 = vmatpush.msra.mxu0 %v63
    %90 = vmatpush.msra.mxu0 %v62
    %91 = vmatpush.msra.mxu0 %v61
    %92 = vmatpush.msra.mxu0 %v60
    %93 = vmatmul.f32.gmra.mxu0 %v58
    %v94 = vpop.f32.mrf.mxu0
    %v95 = vadd.f32 %v76, %v94
    %96 = vdwg.mxu0
    %vm97 = vcmp.gt.f32.partialorder %v95, 0.0
    %v98 = vmul.f32 %v95, 0.01
    %v99 = vsel %vm97, %v95, %v98
    %s100 = scalar_lea.vmem [#allocation5], 128
    %v101 = vld [vmem:[%s100] sm:$0xff]
    %v102 = vld [vmem:[%s100 + $0x8] sm:$0xff]
    %v103 = vld [vmem:[%s100 + $0x10] sm:$0xff]
    %v104 = vld [vmem:[%s100 + $0x18] sm:$0xff]
    %v105 = vld [vmem:[%s100 + $0x20] sm:$0xff]
    %v106 = vld [vmem:[%s100 + $0x28] sm:$0xff]
    %v107 = vld [vmem:[%s100 + $0x30] sm:$0xff]
    %v108 = vld [vmem:[%s100 + $0x38] sm:$0xff]
    %v109 = vld [vmem:[%s100 + $0x40] sm:$0xff]
    %v110 = vld [vmem:[%s100 + $0x48] sm:$0xff]
    %v111 = vld [vmem:[%s100 + $0x50] sm:$0xff]
    %v112 = vld [vmem:[%s100 + $0x58] sm:$0xff]
    %v113 = vld [vmem:[%s100 + $0x60] sm:$0xff]
    %v114 = vld [vmem:[%s100 + $0x68] sm:$0xff]
    %v115 = vld [vmem:[%s100 + $0x70] sm:$0xff]
    %v116 = vld [vmem:[%s100 + $0x78] sm:$0xff]
    %v117 = vperm.slane %v59, 1
    %118 = vmatpush.msra.mxu0 %v116
    %119 = vmatpush.msra.mxu0 %v115
    %120 = vmatpush.msra.mxu0 %v114
    %121 = vmatpush.msra.mxu0 %v113
    %122 = vmatpush.msra.mxu0 %v112
    %123 = vmatpush.msra.mxu0 %v111
    %124 = vmatpush.msra.mxu0 %v110
    %125 = vmatpush.msra.mxu0 %v109
    %126 = vmatpush.msra.mxu0 %v108
    %127 = vmatpush.msra.mxu0 %v107
    %128 = vmatpush.msra.mxu0 %v106
    %129 = vmatpush.msra.mxu0 %v105
    %130 = vmatpush.msra.mxu0 %v104
    %131 = vmatpush.msra.mxu0 %v103
    %132 = vmatpush.msra.mxu0 %v102
    %133 = vmatpush.msra.mxu0 %v101
    %134 = vmatmul.f32.gmra.mxu0 %v99
    %v135 = vpop.f32.mrf.mxu0
    %v136 = vadd.f32 %v117, %v135
    %137 = vdwg.mxu0
    %vm138 = vcmp.gt.f32.partialorder %v136, 0.0
    %v139 = vmul.f32 %v136, 0.01
    %v140 = vsel %vm138, %v136, %v139
    %s141 = scalar_lea.vmem [#allocation5], 256
    %v142 = vld [vmem:[%s141] sm:$0xff]
    %v143 = vld [vmem:[%s141 + $0x8] sm:$0xff]
    %v144 = vld [vmem:[%s141 + $0x10] sm:$0xff]
    %v145 = vld [vmem:[%s141 + $0x18] sm:$0xff]
    %v146 = vld [vmem:[%s141 + $0x20] sm:$0xff]
    %v147 = vld [vmem:[%s141 + $0x28] sm:$0xff]
    %v148 = vld [vmem:[%s141 + $0x30] sm:$0xff]
    %v149 = vld [vmem:[%s141 + $0x38] sm:$0xff]
    %v150 = vld [vmem:[%s141 + $0x40] sm:$0xff]
    %v151 = vld [vmem:[%s141 + $0x48] sm:$0xff]
    %v152 = vld [vmem:[%s141 + $0x50] sm:$0xff]
    %v153 = vld [vmem:[%s141 + $0x58] sm:$0xff]
    %v154 = vld [vmem:[%s141 + $0x60] sm:$0xff]
    %v155 = vld [vmem:[%s141 + $0x68] sm:$0xff]
    %v156 = vld [vmem:[%s141 + $0x70] sm:$0xff]
    %v157 = vld [vmem:[%s141 + $0x78] sm:$0xff]
    %v158 = vperm.slane %v59, 2
    %159 = vmatpush.msra.mxu0 %v157
    %160 = vmatpush.msra.mxu0 %v156
    %161 = vmatpush.msra.mxu0 %v155
    %162 = vmatpush.msra.mxu0 %v154
    %163 = vmatpush.msra.mxu0 %v153
    %164 = vmatpush.msra.mxu0 %v152
    %165 = vmatpush.msra.mxu0 %v151
    %166 = vmatpush.msra.mxu0 %v150
    %167 = vmatpush.msra.mxu0 %v149
    %168 = vmatpush.msra.mxu0 %v148
    %169 = vmatpush.msra.mxu0 %v147
    %170 = vmatpush.msra.mxu0 %v146
    %171 = vmatpush.msra.mxu0 %v145
    %172 = vmatpush.msra.mxu0 %v144
    %173 = vmatpush.msra.mxu0 %v143
    %174 = vmatpush.msra.mxu0 %v142
    %175 = vmatmul.f32.gmra.mxu0 %v140
    %v176 = vpop.f32.mrf.mxu0
    %v177 = vadd.f32 %v158, %v176
    %178 = vdwg.mxu0
    %vm179 = vcmp.gt.f32.partialorder %v177, 0.0
    %v180 = vmul.f32 %v177, 0.01
    %v181 = vsel %vm179, %v177, %v180
    %s182 = scalar_lea.vmem [#allocation5], 384
    %v183 = vld [vmem:[%s182] sm:$0xff]
    %v184 = vld [vmem:[%s182 + $0x8] sm:$0xff]
    %v185 = vld [vmem:[%s182 + $0x10] sm:$0xff]
    %v186 = vld [vmem:[%s182 + $0x18] sm:$0xff]
    %v187 = vld [vmem:[%s182 + $0x20] sm:$0xff]
    %v188 = vld [vmem:[%s182 + $0x28] sm:$0xff]
    %v189 = vld [vmem:[%s182 + $0x30] sm:$0xff]
    %v190 = vld [vmem:[%s182 + $0x38] sm:$0xff]
    %v191 = vld [vmem:[%s182 + $0x40] sm:$0xff]
    %v192 = vld [vmem:[%s182 + $0x48] sm:$0xff]
    %v193 = vld [vmem:[%s182 + $0x50] sm:$0xff]
    %v194 = vld [vmem:[%s182 + $0x58] sm:$0xff]
    %v195 = vld [vmem:[%s182 + $0x60] sm:$0xff]
    %v196 = vld [vmem:[%s182 + $0x68] sm:$0xff]
    %v197 = vld [vmem:[%s182 + $0x70] sm:$0xff]
    %v198 = vld [vmem:[%s182 + $0x78] sm:$0xff]
    %v199 = vperm.slane %v59, 3
    %200 = vmatpush.msra.mxu0 %v198
    %201 = vmatpush.msra.mxu0 %v197
    %202 = vmatpush.msra.mxu0 %v196
    %203 = vmatpush.msra.mxu0 %v195
    %204 = vmatpush.msra.mxu0 %v194
    %205 = vmatpush.msra.mxu0 %v193
    %206 = vmatpush.msra.mxu0 %v192
    %207 = vmatpush.msra.mxu0 %v191
    %208 = vmatpush.msra.mxu0 %v190
    %209 = vmatpush.msra.mxu0 %v189
    %210 = vmatpush.msra.mxu0 %v188
    %211 = vmatpush.msra.mxu0 %v187
    %212 = vmatpush.msra.mxu0 %v186
    %213 = vmatpush.msra.mxu0 %v185
    %214 = vmatpush.msra.mxu0 %v184
    %215 = vmatpush.msra.mxu0 %v183
    %216 = vmatmul.f32.gmra.mxu0 %v181
    %v217 = vpop.f32.mrf.mxu0
    %v218 = vadd.f32 %v199, %v217
    %219 = vdwg.mxu0
    %220 = vst [vmem:[#allocation8] sm:$0xff] %v218
    // Predicated region
    $region26: #{tpu_custom_call.1} parent=1 // pred_check
      _
    $region27: #{tpu_custom_call.1} parent=1 // pred_check_branch
      %222 = sbr.rel (0) target = $region29
    $region28: #{tpu_custom_call.1} parent=1 // pred_region
      %224 = vsyncadd [#allocation4], 0
      %s226 = sshll.u32 [#allocation8], 4
      %s227 = int_to_ptr.vmem [resolvable:$true] %s226
      %s228 = sshll.u32 %s3, 4
      %s229 = int_to_ptr.hbm [resolvable:$true] %s228
      %231 = dma.vmem_to_hbm [thread:$0]  %s227, 128, %s229, [#allocation4]
    $region29: #{tpu_custom_call.1} parent=1 // pred_fallthru
      _
    // Predicated region
    $region30: #{tpu_custom_call.1} parent=1 // pred_check
      _
    $region31: #{tpu_custom_call.1} parent=1 // pred_check_branch
      %233 = sbr.rel (0) target = $region33
    $region32: #{tpu_custom_call.1} parent=1 // pred_region
      %235 = dma.done [#allocation4], 128
    $region33: #{tpu_custom_call.1} parent=1 // pred_fallthru
      _
    %236 = vsyncpa [#allocation3], 1
    %237 = vsyncpa [#allocation6], 1
    %238 = vsyncpa [#allocation4], 1

</llo_original>
